<compile_context>
chip_gen: v5e
topology: v5e:2x2
jax: 0.10.0
libtpu: 0.0.40
codegen_flags: <defaults>
</compile_context>

<pallas_src>
import jax
import jax.numpy as jnp
from jax.experimental import pallas as pl
from jax.experimental.pallas import tpu as pltpu

# ----------------------------- config (small) -------------------------------
B = 2
LATENT = 32             # latent_dim (1024 in original)
GRID = 2                # grid_size (4 in original)
G2 = GRID * GRID
CHANNELS = 3
NUM_DENSE = 512         # num_dense (16384 in original); divisible by GRID**2
NUM_COARSE = NUM_DENSE // G2
H_MLP = 64              # hidden width of coarse MLP (1024 in original)
H_FOLD = 64             # hidden width of AdaptiveFolding (synthetic)
H_CONV = 64             # hidden width of final_conv (512 in original)
H1 = H_FOLD + H_CONV    # fused first-layer width of the point network
TILE_PTS = 256          # point tile (lane axis); multiple of 128, divides NUM_DENSE
TILE_COARSE = 128       # column tile of the coarse output; multiple of 128
BN_EPS = 1e-5
W_DTYPE = jnp.bfloat16  # MXU operand dtype (f32 accumulation everywhere)
VMEM_LIMIT = 64 * 1024 * 1024

assert NUM_DENSE % G2 == 0
assert NUM_DENSE % TILE_PTS == 0 and TILE_PTS % 128 == 0 and TILE_PTS % G2 == 0
assert (CHANNELS * NUM_COARSE) % TILE_COARSE == 0
assert H_FOLD % 8 == 0 and H_CONV % 8 == 0


# ------------------------------- kernels ------------------------------------
def _prologue_kernel(x_ref, w1, b1, w2, b2, pwf, pb1, h_ref, base_ref):
    # x: (B, LATENT)
    x = x_ref[...].astype(W_DTYPE)
    h = jnp.maximum(jnp.dot(x, w1[...], preferred_element_type=jnp.float32) + b1[...], 0.0)
    h = jnp.maximum(jnp.dot(h.astype(W_DTYPE), w2[...],
                            preferred_element_type=jnp.float32) + b2[...], 0.0)
    h_ref[...] = h                                                      # (B, H_MLP)
    # hoisted per-batch feature contribution of the fused point layer-1
    base_ref[...] = jnp.dot(x, pwf[...], preferred_element_type=jnp.float32) + pb1[...]


def _coarse_out_kernel(h_ref, w3_ref, b3_ref, out_ref):
    # one column tile of   coarse_flat = h @ mlp_w3 + b3
    h = h_ref[...].astype(W_DTYPE)
    out_ref[...] = jnp.dot(h, w3_ref[...], preferred_element_type=jnp.float32) + b3_ref[...]


def _point_kernel(base_ref, seedc_ref, pf_ref,
                  fw2, fb2, fw3, fb3,
                  cw1b, cw2, cb2, cw3, cb3,
                  out_ref):
    # Everything is (features, points): the point axis (lanes) is 128-dense.
    # base:  (1, H1, 1)   per-batch hoisted feature partial (+ biases)
    # seedc: (H1, T)      precomputed seed contribution (tile-invariant slab)
    # pf:    (1, C, T)    point_feat residual, channels-major
    z = base_ref[0] + seedc_ref[...]                      # (H1, T) f32
    h1 = jnp.maximum(z[:H_FOLD], 0.0)                     # folding layer-1
    y1_pre = z[H_FOLD:]                                   # final_conv layer-1 (partial)

    # AdaptiveFolding layers 2/3
    h2 = jnp.maximum(
        jnp.dot(fw2[...], h1.astype(W_DTYPE), preferred_element_type=jnp.float32)
        + fb2[...], 0.0)
    folded = (jnp.dot(fw3[...], h2.astype(W_DTYPE), preferred_element_type=jnp.float32)
              + fb3[...])                                 # (C, T)

    # final_conv (BatchNorm folded into weights/biases)
    y1 = jnp.maximum(
        y1_pre + jnp.dot(cw1b[...], folded.astype(W_DTYPE),
                         preferred_element_type=jnp.float32), 0.0)
    y2 = jnp.maximum(
        jnp.dot(cw2[...], y1.astype(W_DTYPE), preferred_element_type=jnp.float32)
        + cb2[...], 0.0)
    fine = (jnp.dot(cw3[...], y2.astype(W_DTYPE), preferred_element_type=jnp.float32)
            + cb3[...] + pf_ref[0])                       # (C, T)
    out_ref[0] = fine


# ------------------------------ parameters ----------------------------------
def init_params(key):
    ks = list(jax.random.split(key, 40))

    def nrm(shape, scale=0.05):
        return jax.random.normal(ks.pop(), shape, jnp.float32) * scale

    p = {}
    # coarse MLP: Linear(L,H) ReLU Linear(H,H) ReLU Linear(H, C*num_coarse); weights (in,out)
    p["mlp_w1"], p["mlp_b1"] = nrm((LATENT, H_MLP)), nrm((H_MLP,))
    p["mlp_w2"], p["mlp_b2"] = nrm((H_MLP, H_MLP)), nrm((H_MLP,))
    p["mlp_w3"], p["mlp_b3"] = nrm((H_MLP, CHANNELS * NUM_COARSE)), nrm((CHANNELS * NUM_COARSE,))
    # AdaptiveFolding (synthetic): Conv1d(L+2,H,1) ReLU Conv1d(H,H,1) ReLU Conv1d(H,C,1)
    p["f_w1"], p["f_b1"] = nrm((LATENT + 2, H_FOLD)), nrm((H_FOLD,))
    p["f_w2"], p["f_b2"] = nrm((H_FOLD, H_FOLD)), nrm((H_FOLD,))
    p["f_w3"], p["f_b3"] = nrm((H_FOLD, CHANNELS)), nrm((CHANNELS,))
    # final_conv: Conv1d(L+C+2,H,1) BN ReLU Conv1d(H,H,1) BN ReLU Conv1d(H,C,1)
    p["c1_w"], p["c1_b"] = nrm((LATENT + CHANNELS + 2, H_CONV)), nrm((H_CONV,))
    p["c2_w"], p["c2_b"] = nrm((H_CONV, H_CONV)), nrm((H_CONV,))
    p["c3_w"], p["c3_b"] = nrm((H_CONV, CHANNELS)), nrm((CHANNELS,))
    for i in (1, 2):
        p[f"bn{i}_g"] = 1.0 + nrm((H_CONV,), 0.1)
        p[f"bn{i}_b"] = nrm((H_CONV,))
        p[f"bn{i}_m"] = nrm((H_CONV,))
        p[f"bn{i}_v"] = jnp.abs(nrm((H_CONV,), 0.1)) + 0.5
    return p


def prepare_kernel_params(p):
    """Fold eval-mode BN into conv weights, fuse the shared first point layer,
    transpose point weights to channels-major, and cast matmul weights to bf16."""
    def fold(wt, b, g, bta, m, v):
        s = g / jnp.sqrt(v + BN_EPS)
        return wt * s[None, :], (b - m) * s + bta

    cw1, cb1 = fold(p["c1_w"], p["c1_b"], p["bn1_g"], p["bn1_b"], p["bn1_m"], p["bn1_v"])
    cw2, cb2 = fold(p["c2_w"], p["c2_b"], p["bn2_g"], p["bn2_b"], p["bn2_m"], p["bn2_v"])

    # split BN-folded conv1 weight by input group: [feat | seed | folded]
    cw1_feat, cw1_seed, cw1_fold = cw1[:LATENT], cw1[LATENT:LATENT + 2], cw1[LATENT + 2:]
    f_feat, f_seed = p["f_w1"][:LATENT], p["f_w1"][LATENT:]

    row = lambda x: x.reshape(1, -1)
    col = lambda x: x.reshape(-1, 1)
    wc = lambda x: x.astype(W_DTYPE)

    return dict(
        # coarse MLP
        mlp_w1=wc(p["mlp_w1"]), mlp_b1=row(p["mlp_b1"]),
        mlp_w2=wc(p["mlp_w2"]), mlp_b2=row(p["mlp_b2"]),
        mlp_w3=wc(p["mlp_w3"]), mlp_b3=row(p["mlp_b3"]),
        # fused point layer-1: feature part (hoisted, per batch) + seed part
        pw_feat=wc(jnp.concatenate([f_feat, cw1_feat], axis=1)),     # (L, H1)
        pb1=row(jnp.concatenate([p["f_b1"], cb1])),                  # (1, H1)
        pw_seed=jnp.concatenate([f_seed, cw1_seed], axis=1),         # (2, H1) f32
        # point-kernel weights, channels-major (out, in)
        fw2_t=wc(p["f_w2"].T), fb2_c=col(p["f_b2"]),
        fw3_t=wc(p["f_w3"].T), fb3_c=col(p["f_b3"]),
        cw1b_t=wc(cw1_fold.T),
        cw2_t=wc(cw2.T), cb2_c=col(cb2),
        cw3_t=wc(p["c3_w"].T), cb3_c=col(p["c3_b"]),
    )


# ------------------------------- forward ------------------------------------
def decoder_forward(feature_global, kp):
    Bb = feature_global.shape[0]
    N = NUM_DENSE

    # ---- prologue: coarse hidden + hoisted per-batch point layer-1 partial ----
    pro_args = [kp[k] for k in ("mlp_w1", "mlp_b1", "mlp_w2", "mlp_b2", "pw_feat", "pb1")]
    h_mid, base = pl.pallas_call(
        _prologue_kernel,
        out_shape=(jax.ShapeDtypeStruct((Bb, H_MLP), jnp.float32),
                   jax.ShapeDtypeStruct((Bb, H1), jnp.float32)),
        grid=(1,),
        in_specs=[pl.BlockSpec((Bb, LATENT), lambda i: (0, 0))]
        + [pl.BlockSpec(a.shape, lambda i: (0, 0)) for a in pro_args],
        out_specs=(pl.BlockSpec((Bb, H_MLP), lambda i: (0, 0)),
                   pl.BlockSpec((Bb, H1), lambda i: (0, 0))),
        compiler_params=pltpu.CompilerParams(
            dimension_semantics=("arbitrary",), vmem_limit_bytes=VMEM_LIMIT),
    )(feature_global, *pro_args)

    # ---- coarse output: h @ mlp_w3, tiled over output columns ----
    ncols = CHANNELS * NUM_COARSE
    nct = ncols // TILE_COARSE
    coarse_flat = pl.pallas_call(
        _coarse_out_kernel,
        out_shape=jax.ShapeDtypeStruct((Bb, ncols), jnp.float32),
        grid=(nct,),
        in_specs=[pl.BlockSpec((Bb, H_MLP), lambda j: (0, 0)),
                  pl.BlockSpec((H_MLP, TILE_COARSE), lambda j: (0, j)),
                  pl.BlockSpec((1, TILE_COARSE), lambda j: (0, j))],
        out_specs=pl.BlockSpec((Bb, TILE_COARSE), lambda j: (0, j)),
        compiler_params=pltpu.CompilerParams(
            dimension_semantics=("parallel",), vmem_limit_bytes=VMEM_LIMIT),
    )(h_mid, kp["mlp_w3"], kp["mlp_b3"])
    coarse = coarse_flat.reshape(Bb, NUM_COARSE, CHANNELS)

    # ---- glue: pure layout + one tiny constant matmul (no per-point compute) ----
    pf_cm = jnp.repeat(coarse, G2, axis=1).transpose(0, 2, 1)           # (B, C, N)

    # seed contribution of the fused first layer, one lane-aligned (H1, TILE) slab
    lin = jnp.linspace(-0.05, 0.05, GRID, dtype=jnp.float32)
    fs = jnp.stack([jnp.tile(lin, GRID), jnp.repeat(lin, GRID)], axis=0)  # (2, G2)
    seed_cols = jnp.tile(fs, (1, TILE_PTS // G2))                          # (2, TILE)
    seedc = jnp.dot(kp["pw_seed"].T, seed_cols)                            # (H1, TILE)

    base_col = base.reshape(Bb, H1, 1)                                     # per-batch column

    # ---- fused AdaptiveFolding + final_conv + residual (Pallas, channels-major) ----
    pt_args = [kp[k] for k in ("fw2_t", "fb2_c", "fw3_t", "fb3_c",
                               "cw1b_t", "cw2_t", "cb2_c", "cw3_t", "cb3_c")]
    nt = N // TILE_PTS
    fine_cm = pl.pallas_call(
        _point_kernel,
        out_shape=jax.ShapeDtypeStruct((Bb, CHANNELS, N), jnp.float32),
        grid=(Bb, nt),
        in_specs=[pl.BlockSpec((1, H1, 1), lambda b, t: (b, 0, 0)),
                  pl.BlockSpec((H1, TILE_PTS), lambda b, t: (0, 0)),
                  pl.BlockSpec((1, CHANNELS, TILE_PTS), lambda b, t: (b, 0, t))]
        + [pl.BlockSpec(a.shape, lambda b, t: (0, 0)) for a in pt_args],
        out_specs=pl.BlockSpec((1, CHANNELS, TILE_PTS), lambda b, t: (b, 0, t)),
        compiler_params=pltpu.CompilerParams(
            dimension_semantics=("parallel", "parallel"),
            vmem_limit_bytes=VMEM_LIMIT),
    )(base_col, seedc, pf_cm, *pt_args)

    fine = fine_cm.transpose(0, 2, 1)   # (B, N, C) == torch `fine.transpose(1, 2)`
    return coarse, fine


# ------------------------ pure-JAX reference (NCHW) --------------------------
def reference_forward(feature_global, p):
    Bb = feature_global.shape[0]
    h = jnp.maximum(feature_global @ p["mlp_w1"] + p["mlp_b1"], 0.0)
    h = jnp.maximum(h @ p["mlp_w2"] + p["mlp_b2"], 0.0)
    coarse = (h @ p["mlp_w3"] + p["mlp_b3"]).reshape(Bb, NUM_COARSE, CHANNELS)

    point_feat = jnp.repeat(coarse, G2, axis=1).transpose(0, 2, 1)       # (B, C, N)

    lin = jnp.linspace(-0.05, 0.05, GRID, dtype=jnp.float32)
    fs = jnp.stack([jnp.tile(lin, GRID), jnp.repeat(lin, GRID)], axis=0)
    seed = jnp.tile(fs, (1, NUM_COARSE))
    seed = jnp.broadcast_to(seed[None], (Bb, 2, NUM_DENSE))
    fge = jnp.broadcast_to(feature_global[:, :, None], (Bb, LATENT, NUM_DENSE))

    def conv1x1(x, w, b):
        return jnp.einsum("bcn,cd->bdn", x, w) + b[None, :, None]

    def bn(x, g, bta, m, v):
        return (x - m[None, :, None]) / jnp.sqrt(v[None, :, None] + BN_EPS) * g[None, :, None] + bta[None, :, None]

    xin = jnp.concatenate([fge, seed], axis=1)
    h1 = jnp.maximum(conv1x1(xin, p["f_w1"], p["f_b1"]), 0.0)
    h1 = jnp.maximum(conv1x1(h1, p["f_w2"], p["f_b2"]), 0.0)
    folded = conv1x1(h1, p["f_w3"], p["f_b3"])

    feat = jnp.concatenate([fge, seed, folded], axis=1)
    y = jnp.maximum(bn(conv1x1(feat, p["c1_w"], p["c1_b"]),
                       p["bn1_g"], p["bn1_b"], p["bn1_m"], p["bn1_v"]), 0.0)
    y = jnp.maximum(bn(conv1x1(y, p["c2_w"], p["c2_b"]),
                       p["bn2_g"], p["bn2_b"], p["bn2_m"], p["bn2_v"]), 0.0)
    fine = conv1x1(y, p["c3_w"], p["c3_b"]) + point_feat
    return coarse, fine.transpose(0, 2, 1)


# --------------------------------- main --------------------------------------
if __name__ == "__main__":
    key = jax.random.PRNGKey(0)
    kx, kparam = jax.random.split(key)
    feature_global = jax.random.normal(kx, (B, LATENT), jnp.float32)

    params = init_params(kparam)
    kernel_params = prepare_kernel_params(params)

    coarse, fine = decoder_forward(feature_global, kernel_params)
    jax.block_until_ready((coarse, fine))

    assert coarse.shape == (B, NUM_COARSE, CHANNELS)
    assert fine.shape == (B, NUM_DENSE, CHANNELS)

    rc, rf = reference_forward(feature_global, params)
    # kernel path uses bf16 MXU weights (f32 accumulation) vs f32 reference
    assert jnp.allclose(coarse, rc, atol=2e-2, rtol=2e-2), "coarse mismatch"
    assert jnp.allclose(fine, rf, atol=2e-2, rtol=2e-2), "fine mismatch"

    print("KERNEL_OK")
</pallas_src>

<mosaic_0001>
module attributes {stable_mosaic.version = 11 : i64} {
  func.func @_prologue_kernel(%arg0: i32, %arg1: memref<2x32xf32, #tpu.memory_space<vmem>>, %arg2: memref<32x64xbf16, #tpu.memory_space<vmem>>, %arg3: memref<1x64xf32, #tpu.memory_space<vmem>>, %arg4: memref<64x64xbf16, #tpu.memory_space<vmem>>, %arg5: memref<1x64xf32, #tpu.memory_space<vmem>>, %arg6: memref<32x128xbf16, #tpu.memory_space<vmem>>, %arg7: memref<1x128xf32, #tpu.memory_space<vmem>>, %arg8: memref<2x64xf32, #tpu.memory_space<vmem>>, %arg9: memref<2x128xf32, #tpu.memory_space<vmem>>) attributes {dimension_semantics = [#tpu.dimension_semantics<arbitrary>], iteration_bounds = array<i64: 1>, scalar_prefetch = 0 : i64, scratch_operands = 0 : i64, tpu.core_type = #tpu.core_type<tc>, window_params = [{pipeline_mode = #tpu.pipeline_mode<synchronous>, transform_indices = @transform_0, window_bounds = array<i64: 2, 32>}, {pipeline_mode = #tpu.pipeline_mode<synchronous>, transform_indices = @transform_1, window_bounds = array<i64: 32, 64>}, {pipeline_mode = #tpu.pipeline_mode<synchronous>, transform_indices = @transform_2, window_bounds = array<i64: 1, 64>}, {pipeline_mode = #tpu.pipeline_mode<synchronous>, transform_indices = @transform_3, window_bounds = array<i64: 64, 64>}, {pipeline_mode = #tpu.pipeline_mode<synchronous>, transform_indices = @transform_4, window_bounds = array<i64: 1, 64>}, {pipeline_mode = #tpu.pipeline_mode<synchronous>, transform_indices = @transform_5, window_bounds = array<i64: 32, 128>}, {pipeline_mode = #tpu.pipeline_mode<synchronous>, transform_indices = @transform_6, window_bounds = array<i64: 1, 128>}, {pipeline_mode = #tpu.pipeline_mode<synchronous>, transform_indices = @transform_7, window_bounds = array<i64: 2, 64>}, {pipeline_mode = #tpu.pipeline_mode<synchronous>, transform_indices = @transform_8, window_bounds = array<i64: 2, 128>}]} {
    %c0 = arith.constant 0 : index
    %c0_0 = arith.constant 0 : index
    %0 = vector.load %arg1[%c0, %c0_0] : memref<2x32xf32, #tpu.memory_space<vmem>>, vector<2x32xf32>
    %1 = arith.truncf %0 : vector<2x32xf32> to vector<2x32xbf16>
    %c0_1 = arith.constant 0 : index
    %c0_2 = arith.constant 0 : index
    %2 = vector.load %arg2[%c0_1, %c0_2] : memref<32x64xbf16, #tpu.memory_space<vmem>>, vector<32x64xbf16>
    %cst = arith.constant dense<0.000000e+00> : vector<2x64xf32>
    %3 = tpu.matmul %1, %2, %cst {dimension_numbers = #tpu.dot_dimension_numbers<[1], [0], [0], [1], [0, 0, 1, 1], [], []>} : vector<2x32xbf16>, vector<32x64xbf16>, vector<2x64xf32> -> vector<2x64xf32>
    %c0_3 = arith.constant 0 : index
    %c0_4 = arith.constant 0 : index
    %4 = vector.load %arg3[%c0_3, %c0_4] : memref<1x64xf32, #tpu.memory_space<vmem>>, vector<1x64xf32>
    %5 = vector.broadcast %4 : vector<1x64xf32> to vector<2x64xf32>
    %6 = arith.addf %3, %5 : vector<2x64xf32>
    %cst_5 = arith.constant 0.000000e+00 : f32
    %7 = vector.broadcast %cst_5 : f32 to vector<2x64xf32>
    %8 = arith.maximumf %6, %7 : vector<2x64xf32>
    %9 = arith.truncf %8 : vector<2x64xf32> to vector<2x64xbf16>
    %c0_6 = arith.constant 0 : index
    %c0_7 = arith.constant 0 : index
    %10 = vector.load %arg4[%c0_6, %c0_7] : memref<64x64xbf16, #tpu.memory_space<vmem>>, vector<64x64xbf16>
    %cst_8 = arith.constant dense<0.000000e+00> : vector<2x64xf32>
    %11 = tpu.matmul %9, %10, %cst_8 {dimension_numbers = #tpu.dot_dimension_numbers<[1], [0], [0], [1], [0, 0, 1, 1], [], []>} : vector<2x64xbf16>, vector<64x64xbf16>, vector<2x64xf32> -> vector<2x64xf32>
    %c0_9 = arith.constant 0 : index
    %c0_10 = arith.constant 0 : index
    %12 = vector.load %arg5[%c0_9, %c0_10] : memref<1x64xf32, #tpu.memory_space<vmem>>, vector<1x64xf32>
    %13 = vector.broadcast %12 : vector<1x64xf32> to vector<2x64xf32>
    %14 = arith.addf %11, %13 : vector<2x64xf32>
    %cst_11 = arith.constant 0.000000e+00 : f32
    %15 = vector.broadcast %cst_11 : f32 to vector<2x64xf32>
    %16 = arith.maximumf %14, %15 : vector<2x64xf32>
    %c0_12 = arith.constant 0 : index
    %c0_13 = arith.constant 0 : index
    %17 = vector.load %arg8[%c0_12, %c0_13] : memref<2x64xf32, #tpu.memory_space<vmem>>, vector<2x64xf32>
    tpu.vector_store %arg8[%c0_12, %c0_13], %16 {strides = array<i32>} : memref<2x64xf32, #tpu.memory_space<vmem>>, vector<2x64xf32>,
    %c0_14 = arith.constant 0 : index
    %c0_15 = arith.constant 0 : index
    %18 = vector.load %arg6[%c0_14, %c0_15] : memref<32x128xbf16, #tpu.memory_space<vmem>>, vector<32x128xbf16>
    %cst_16 = arith.constant dense<0.000000e+00> : vector<2x128xf32>
    %19 = tpu.matmul %1, %18, %cst_16 {dimension_numbers = #tpu.dot_dimension_numbers<[1], [0], [0], [1], [0, 0, 1, 1], [], []>} : vector<2x32xbf16>, vector<32x128xbf16>, vector<2x128xf32> -> vector<2x128xf32>
    %c0_17 = arith.constant 0 : index
    %c0_18 = arith.constant 0 : index
    %20 = vector.load %arg7[%c0_17, %c0_18] : memref<1x128xf32, #tpu.memory_space<vmem>>, vector<1x128xf32>
    %21 = vector.broadcast %20 : vector<1x128xf32> to vector<2x128xf32>
    %22 = arith.addf %19, %21 : vector<2x128xf32>
    %c0_19 = arith.constant 0 : index
    %c0_20 = arith.constant 0 : index
    %23 = vector.load %arg9[%c0_19, %c0_20] : memref<2x128xf32, #tpu.memory_space<vmem>>, vector<2x128xf32>
    tpu.vector_store %arg9[%c0_19, %c0_20], %22 {strides = array<i32>} : memref<2x128xf32, #tpu.memory_space<vmem>>, vector<2x128xf32>,
    return
  }
  func.func @transform_0(%arg0: i32) -> (i32, i32) {
    %c0_i32 = arith.constant 0 : i32
    %c0_i32_0 = arith.constant 0 : i32
    %c0_i32_1 = arith.constant 0 : i32
    return %c0_i32, %c0_i32_0 : i32, i32
  }
  func.func @transform_1(%arg0: i32) -> (i32, i32) {
    %c0_i32 = arith.constant 0 : i32
    %c0_i32_0 = arith.constant 0 : i32
    %c0_i32_1 = arith.constant 0 : i32
    return %c0_i32, %c0_i32_0 : i32, i32
  }
  func.func @transform_2(%arg0: i32) -> (i32, i32) {
    %c0_i32 = arith.constant 0 : i32
    %c0_i32_0 = arith.constant 0 : i32
    %c0_i32_1 = arith.constant 0 : i32
    return %c0_i32, %c0_i32_0 : i32, i32
  }
  func.func @transform_3(%arg0: i32) -> (i32, i32) {
    %c0_i32 = arith.constant 0 : i32
    %c0_i32_0 = arith.constant 0 : i32
    %c0_i32_1 = arith.constant 0 : i32
    return %c0_i32, %c0_i32_0 : i32, i32
  }
  func.func @transform_4(%arg0: i32) -> (i32, i32) {
    %c0_i32 = arith.constant 0 : i32
    %c0_i32_0 = arith.constant 0 : i32
    %c0_i32_1 = arith.constant 0 : i32
    return %c0_i32, %c0_i32_0 : i32, i32
  }
  func.func @transform_5(%arg0: i32) -> (i32, i32) {
    %c0_i32 = arith.constant 0 : i32
    %c0_i32_0 = arith.constant 0 : i32
    %c0_i32_1 = arith.constant 0 : i32
    return %c0_i32, %c0_i32_0 : i32, i32
  }
  func.func @transform_6(%arg0: i32) -> (i32, i32) {
    %c0_i32 = arith.constant 0 : i32
    %c0_i32_0 = arith.constant 0 : i32
    %c0_i32_1 = arith.constant 0 : i32
    return %c0_i32, %c0_i32_0 : i32, i32
  }
  func.func @transform_7(%arg0: i32) -> (i32, i32) {
    %c0_i32 = arith.constant 0 : i32
    %c0_i32_0 = arith.constant 0 : i32
    %c0_i32_1 = arith.constant 0 : i32
    return %c0_i32, %c0_i32_0 : i32, i32
  }
  func.func @transform_8(%arg0: i32) -> (i32, i32) {
    %c0_i32 = arith.constant 0 : i32
    %c0_i32_0 = arith.constant 0 : i32
    %c0_i32_1 = arith.constant 0 : i32
    return %c0_i32, %c0_i32_0 : i32, i32
  }
}

</mosaic_0001>

<llo_original>
// kernel: tpu_custom_call.1
$region0: #{tpu_custom_call.1}
  #allocation0 [shape = 'u32[]', space=smem, size = 0x4, offset = 0x4, fixed_abs, tag = 'smem constant byte address 0x4 - core index']
  #allocation1 [shape = 'u32[72,128]{1,0:T(1,128)}', space=vmem, size = 0x9000, scoped, tag = 'internal scratch']
  %s0 = inlined_call_operand.hbm [shape: f32[2,32], index: 0, kind: input, shape index: {}]
  %s1 = inlined_call_operand.hbm [shape: bf16[32,64], index: 1, kind: input, shape index: {}]
  %s2 = inlined_call_operand.vmem [shape: f32[1,64], index: 2, kind: input, shape index: {}]
  %s3 = inlined_call_operand.hbm [shape: bf16[64,64], index: 3, kind: input, shape index: {}]
  %s4 = inlined_call_operand.vmem [shape: f32[1,64], index: 4, kind: input, shape index: {}]
  %s5 = inlined_call_operand.hbm [shape: bf16[32,128], index: 5, kind: input, shape index: {}]
  %s6 = inlined_call_operand.vmem [shape: f32[1,128], index: 6, kind: input, shape index: {}]
  %s7 = inlined_call_operand.hbm [shape: f32[2,64], index: 7, kind: output, shape index: {0}]
  %s8 = inlined_call_operand.hbm [shape: f32[2,128], index: 8, kind: output, shape index: {1}]
  %9 = xla_tuple %s7, %s8
  %s10 = sld [smem:[#allocation0]]
  $region62: #{tpu_custom_call.1} parent=0
    _
  %s12 = ssub.s32 1, %s10
  %s13 = scalar_select 0, %s12, %s10
  $region1: #{tpu_custom_call.1} parent=0
    #allocation2 [shape = 'u8[1024]{0}', space=vmem, size = 0x400, scoped, tag = 'input window, operand 0, single buffered']
    #allocation3 [shape = 's32[1]{0}', space=sflag, size = 0x4, scoped, tag = 'scoped memory for tpu_custom_call.1']
    #allocation4 [shape = 's32[1]{0}', space=sflag, size = 0x4, scoped, tag = 'scoped memory for tpu_custom_call.1']
    #allocation5 [shape = 'u8[8192]{0}', space=vmem, size = 0x2000, scoped, tag = 'input window, operand 1, single buffered']
    #allocation6 [shape = 's32[1]{0}', space=sflag, size = 0x4, scoped, tag = 'scoped memory for tpu_custom_call.1']
    #allocation7 [shape = 'u8[16384]{0}', space=vmem, size = 0x4000, scoped, tag = 'input window, operand 3, single buffered']
    #allocation8 [shape = 'u8[8192]{0}', space=vmem, size = 0x2000, scoped, tag = 'input window, operand 5, single buffered']
    #allocation9 [shape = 's32[1]{0}', space=sflag, size = 0x4, scoped, tag = 'scoped memory for tpu_custom_call.1']
    #allocation10 [shape = 'u8[1024]{0}', space=vmem, size = 0x400, scoped, tag = 'output window, operand 0, single buffered']
    #allocation11 [shape = 'u8[1024]{0}', space=vmem, size = 0x400, scoped, tag = 'output window, operand 1, single buffered']
    #allocation12 [shape = 's32[1]{0}', space=sflag, size = 0x4, scoped, tag = 'scoped memory for tpu_custom_call.1']
    %14 = vsyncpa [#allocation3], 0
    %15 = vsyncpa [#allocation6], 0
    %16 = vsyncpa [#allocation9], 0
    %17 = vsyncpa [#allocation4], 0
    %18 = vsyncpa [#allocation12], 0
    // Predicated region
    $region2: #{tpu_custom_call.1} parent=1 // pred_check
      _
    $region3: #{tpu_custom_call.1} parent=1 // pred_check_branch
      %20 = sbr.rel (0) target = $region5
    $region4: #{tpu_custom_call.1} parent=1 // pred_region
      %22 = vsyncadd [#allocation3], 0
      %s24 = sshll.u32 %s0, 4
      %s25 = int_to_ptr.hbm [resolvable:$true] %s24
      %s26 = sshll.u32 [#allocation2], 4
      %s27 = int_to_ptr.vmem [resolvable:$true] %s26
      %29 = dma.hbm_to_vmem [thread:$0]  %s25, 32, %s27, [#allocation3]
    $region5: #{tpu_custom_call.1} parent=1 // pred_fallthru
      _
    // Predicated region
    $region6: #{tpu_custom_call.1} parent=1 // pred_check
      _
    $region7: #{tpu_custom_call.1} parent=1 // pred_check_branch
      %31 = sbr.rel (0) target = $region9
    $region8: #{tpu_custom_call.1} parent=1 // pred_region
      %33 = vsyncadd [#allocation6], 0
      %s34 = sshll.u32 %s1, 4
      %s35 = int_to_ptr.hbm [resolvable:$true] %s34
      %s36 = sshll.u32 [#allocation5], 4
      %s37 = int_to_ptr.vmem [resolvable:$true] %s36
      %42 = dma.hbm_to_vmem [thread:$0]  %s35, 256, %s37, [#allocation6], 64, 64, 4
    $region9: #{tpu_custom_call.1} parent=1 // pred_fallthru
      _
    // Predicated region
    $region10: #{tpu_custom_call.1} parent=1 // pred_check
      _
    $region11: #{tpu_custom_call.1} parent=1 // pred_check_branch
      %44 = sbr.rel (0) target = $region13
    $region12: #{tpu_custom_call.1} parent=1 // pred_region
      _
    $region13: #{tpu_custom_call.1} parent=1 // pred_fallthru
      _
    // Predicated region
    $region14: #{tpu_custom_call.1} parent=1 // pred_check
      _
    $region15: #{tpu_custom_call.1} parent=1 // pred_check_branch
      %46 = sbr.rel (0) target = $region17
    $region16: #{tpu_custom_call.1} parent=1 // pred_region
      %48 = vsyncadd [#allocation6], 0
      %s49 = sshll.u32 %s3, 4
      %s50 = int_to_ptr.hbm [resolvable:$true] %s49
      %s51 = sshll.u32 [#allocation7], 4
      %s52 = int_to_ptr.vmem [resolvable:$true] %s51
      %57 = dma.hbm_to_vmem [thread:$0]  %s50, 512, %s52, [#allocation6], 64, 64, 4
    $region17: #{tpu_custom_call.1} parent=1 // pred_fallthru
      _
    // Predicated region
    $region18: #{tpu_custom_call.1} parent=1 // pred_check
      _
    $region19: #{tpu_custom_call.1} parent=1 // pred_check_branch
      %59 = sbr.rel (0) target = $region21
    $region20: #{tpu_custom_call.1} parent=1 // pred_region
      _
    $region21: #{tpu_custom_call.1} parent=1 // pred_fallthru
      _
    // Predicated region
    $region22: #{tpu_custom_call.1} parent=1 // pred_check
      _
    $region23: #{tpu_custom_call.1} parent=1 // pred_check_branch
      %61 = sbr.rel (0) target = $region25
    $region24: #{tpu_custom_call.1} parent=1 // pred_region
      %63 = vsyncadd [#allocation9], 0
      %s64 = sshll.u32 %s5, 4
      %s65 = int_to_ptr.hbm [resolvable:$true] %s64
      %s66 = sshll.u32 [#allocation8], 4
      %s67 = int_to_ptr.vmem [resolvable:$true] %s66
      %72 = dma.hbm_to_vmem [thread:$0]  %s65, 256, %s67, [#allocation9], 64, 64, 4
    $region25: #{tpu_custom_call.1} parent=1 // pred_fallthru
      _
    // Predicated region
    $region26: #{tpu_custom_call.1} parent=1 // pred_check
      _
    $region27: #{tpu_custom_call.1} parent=1 // pred_check_branch
      %74 = sbr.rel (0) target = $region29
    $region28: #{tpu_custom_call.1} parent=1 // pred_region
      _
    $region29: #{tpu_custom_call.1} parent=1 // pred_fallthru
      _
    // Predicated region
    $region30: #{tpu_custom_call.1} parent=1 // pred_check
      _
    $region31: #{tpu_custom_call.1} parent=1 // pred_check_branch
      %76 = sbr.rel (0) target = $region33
    $region32: #{tpu_custom_call.1} parent=1 // pred_region
      %78 = dma.done [#allocation3], 32
    $region33: #{tpu_custom_call.1} parent=1 // pred_fallthru
      _
    // Predicated region
    $region34: #{tpu_custom_call.1} parent=1 // pred_check
      _
    $region35: #{tpu_custom_call.1} parent=1 // pred_check_branch
      %80 = sbr.rel (0) target = $region37
    $region36: #{tpu_custom_call.1} parent=1 // pred_region
      %82 = dma.done [#allocation6], 256
    $region37: #{tpu_custom_call.1} parent=1 // pred_fallthru
      _
    // Predicated region
    $region38: #{tpu_custom_call.1} parent=1 // pred_check
      _
    $region39: #{tpu_custom_call.1} parent=1 // pred_check_branch
      %84 = sbr.rel (0) target = $region41
    $region40: #{tpu_custom_call.1} parent=1 // pred_region
      %86 = dma.done [#allocation6], 512
    $region41: #{tpu_custom_call.1} parent=1 // pred_fallthru
      _
    // Predicated region
    $region42: #{tpu_custom_call.1} parent=1 // pred_check
      _
    $region43: #{tpu_custom_call.1} parent=1 // pred_check_branch
      %88 = sbr.rel (0) target = $region45
    $region44: #{tpu_custom_call.1} parent=1 // pred_region
      %90 = dma.done [#allocation9], 256
    $region45: #{tpu_custom_call.1} parent=1 // pred_fallthru
      _
    %v92 = vld [vmem:[#allocation2] sm:$0x3]
    %v93 = vpack.c.bf16 %v92, %v92
    %v94 = vld [vmem:[#allocation5] sm:$0xf]
    %v95 = vld [vmem:[#allocation5 + $0x4] sm:$0xf]
    %v96 = vld [vmem:[#allocation5 + $0x8] sm:$0xf]
    %v97 = vld [vmem:[#allocation5 + $0xc] sm:$0xf]
    %v98 = vld [vmem:[%s2] sm:$0x1]
    %v100 = vperm.slane %v98, 0
    %v106 = vunpack.c.l.b16 %v94
    %v107 = vunpack.c.l.b16 %v95
    %v108 = vunpack.c.l.b16 %v96
    %v109 = vunpack.c.l.b16 %v97
    %v110 = vpack.c.b16 %v107, %v106
    %v111 = vpack.c.b16 %v109, %v108
    %vm114 = vcmask 261120
    %v116 = vsel %vm114, %v93, 0
    %118 = vmatpush.bf16.msra.mxu0 0
    %119 = vmatpush.bf16.msra.mxu0 0
    %120 = vmatpush.bf16.msra.mxu0 0
    %121 = vmatpush.bf16.msra.mxu0 0
    %122 = vmatpush.bf16.msra.mxu0 0
    %123 = vmatpush.bf16.msra.mxu0 0
    %124 = vmatpush.bf16.msra.mxu0 %v111
    %125 = vmatpush.bf16.msra.mxu0 %v110
    %126 = vmatmul.bf16.gmra.mxu0 %v116
    %v127 = vpop.f32.mrf.mxu0
    %v128 = vadd.f32 %v100, %v127
    %v129 = vpop.f32.mrf.mxu0
    %130 = vdwg.mxu0
    %v131 = vmax.f32 %v128, 0.0
    %v132 = vpack.c.bf16 %v131, %v131
    %v133 = vld [vmem:[#allocation7] sm:$0xf]
    %v134 = vld [vmem:[#allocation7 + $0x4] sm:$0xf]
    %v135 = vld [vmem:[#allocation7 + $0x8] sm:$0xf]
    %v136 = vld [vmem:[#allocation7 + $0xc] sm:$0xf]
    %v137 = vld [vmem:[#allocation7 + $0x10] sm:$0xf]
    %v138 = vld [vmem:[#allocation7 + $0x14] sm:$0xf]
    %v139 = vld [vmem:[#allocation7 + $0x18] sm:$0xf]
    %v140 = vld [vmem:[#allocation7 + $0x1c] sm:$0xf]
    %v141 = vld [vmem:[%s4] sm:$0x1]
    %v143 = vperm.slane %v141, 0
    %v153 = vunpack.c.l.b16 %v133
    %v154 = vunpack.c.l.b16 %v134
    %v155 = vunpack.c.l.b16 %v135
    %v156 = vunpack.c.l.b16 %v136
    %v157 = vunpack.c.l.b16 %v137
    %v158 = vunpack.c.l.b16 %v138
    %v159 = vunpack.c.l.b16 %v139
    %v160 = vunpack.c.l.b16 %v140
    %v161 = vpack.c.b16 %v154, %v153
    %v162 = vpack.c.b16 %v156, %v155
    %v163 = vpack.c.b16 %v158, %v157
    %v164 = vpack.c.b16 %v160, %v159
    %vm169 = vcmask 523264
    %v171 = vsel %vm169, %v132, 0
    %173 = vmatpush.bf16.msra.mxu0 0
    %174 = vmatpush.bf16.msra.mxu0 0
    %175 = vmatpush.bf16.msra.mxu0 0
    %176 = vmatpush.bf16.msra.mxu0 0
    %177 = vmatpush.bf16.msra.mxu0 %v164
    %178 = vmatpush.bf16.msra.mxu0 %v163
    %179 = vmatpush.bf16.msra.mxu0 %v162
    %180 = vmatpush.bf16.msra.mxu0 %v161
    %181 = vmatmul.bf16.gmra.mxu0 %v171
    %v182 = vpop.f32.mrf.mxu0
    %v183 = vadd.f32 %v143, %v182
    %v184 = vpop.f32.mrf.mxu0
    %185 = vdwg.mxu0
    %v186 = vmax.f32 %v183, 0.0
    %vm187 = vcmask 517120
    %188 = vst.msk [vmem:[#allocation10] sm:$0x3] %vm187, %v186
    %v189 = vld [vmem:[#allocation8] sm:$0xf]
    %v190 = vld [vmem:[#allocation8 + $0x4] sm:$0xf]
    %v191 = vld [vmem:[#allocation8 + $0x8] sm:$0xf]
    %v192 = vld [vmem:[#allocation8 + $0xc] sm:$0xf]
    %v193 = vld [vmem:[%s6] sm:$0x1]
    %v195 = vperm.slane %v193, 0
    %v201 = vunpack.c.l.b16 %v189
    %v202 = vunpack.c.l.b16 %v190
    %v203 = vunpack.c.l.b16 %v191
    %v204 = vunpack.c.l.b16 %v192
    %v205 = vpack.c.b16 %v202, %v201
    %v206 = vpack.c.b16 %v204, %v203
    %209 = vmatpush.bf16.msra.mxu0 0
    %210 = vmatpush.bf16.msra.mxu0 0
    %211 = vmatpush.bf16.msra.mxu0 0
    %212 = vmatpush.bf16.msra.mxu0 0
    %213 = vmatpush.bf16.msra.mxu0 0
    %214 = vmatpush.bf16.msra.mxu0 0
    %215 = vmatpush.bf16.msra.mxu0 %v206
    %216 = vmatpush.bf16.msra.mxu0 %v205
    %217 = vmatmul.bf16.gmra.mxu0 %v116
    %v218 = vpop.f32.mrf.mxu0
    %v219 = vadd.f32 %v195, %v218
    %v220 = vpop.f32.mrf.mxu0
    %221 = vdwg.mxu0
    %222 = vst [vmem:[#allocation11] sm:$0x3] %v219
    // Predicated region
    $region46: #{tpu_custom_call.1} parent=1 // pred_check
      _
    $region47: #{tpu_custom_call.1} parent=1 // pred_check_branch
      %224 = sbr.rel (0) target = $region49
    $region48: #{tpu_custom_call.1} parent=1 // pred_region
      %226 = vsyncadd [#allocation4], 0
      %s228 = sshll.u32 [#allocation10], 4
      %s229 = int_to_ptr.vmem [resolvable:$true] %s228
      %s230 = sshll.u32 %s7, 4
      %s231 = int_to_ptr.hbm [resolvable:$true] %s230
      %233 = dma.vmem_to_hbm [thread:$0]  %s229, 32, %s231, [#allocation4]
    $region49: #{tpu_custom_call.1} parent=1 // pred_fallthru
      _
    // Predicated region
    $region50: #{tpu_custom_call.1} parent=1 // pred_check
      _
    $region51: #{tpu_custom_call.1} parent=1 // pred_check_branch
      %235 = sbr.rel (0) target = $region53
    $region52: #{tpu_custom_call.1} parent=1 // pred_region
      %237 = vsyncadd [#allocation12], 0
      %s239 = sshll.u32 [#allocation11], 4
      %s240 = int_to_ptr.vmem [resolvable:$true] %s239
      %s241 = sshll.u32 %s8, 4
      %s242 = int_to_ptr.hbm [resolvable:$true] %s241
      %244 = dma.vmem_to_hbm [thread:$0]  %s240, 32, %s242, [#allocation12]
    $region53: #{tpu_custom_call.1} parent=1 // pred_fallthru
      _
    // Predicated region
    $region54: #{tpu_custom_call.1} parent=1 // pred_check
      _
    $region55: #{tpu_custom_call.1} parent=1 // pred_check_branch
      %246 = sbr.rel (0) target = $region57
    $region56: #{tpu_custom_call.1} parent=1 // pred_region
      %248 = dma.done [#allocation4], 32
    $region57: #{tpu_custom_call.1} parent=1 // pred_fallthru
      _
    // Predicated region
    $region58: #{tpu_custom_call.1} parent=1 // pred_check
      _
    $region59: #{tpu_custom_call.1} parent=1 // pred_check_branch
      %250 = sbr.rel (0) target = $region61
    $region60: #{tpu_custom_call.1} parent=1 // pred_region
      %252 = dma.done [#allocation12], 32
    $region61: #{tpu_custom_call.1} parent=1 // pred_fallthru
      _
    %253 = vsyncpa [#allocation3], 1
    %254 = vsyncpa [#allocation6], 1
    %255 = vsyncpa [#allocation9], 1
    %256 = vsyncpa [#allocation4], 1
    %257 = vsyncpa [#allocation12], 1

</llo_original>
